<compile_context>
chip_gen: v7x
topology: tpu7x:2x2x1
jax: 0.10.0
libtpu: 0.0.40
codegen_flags: <defaults>
</compile_context>

<pallas_src>
import functools

import jax
import jax.numpy as jnp
from jax.experimental import pallas as pl
from jax.experimental.pallas import tpu as pltpu


def _round_up(x, m):
    return (x + m - 1) // m * m


def _gaussian_variation_kernel(
    ctx_ref, eps_ref,
    w0_ref, b0_ref,
    wmv1_ref, bmv1_ref,
    wmv2_ref, bmv2_ref,
    out_ref,
    *, z_pad,
):
    # ctx_fc: Linear + Tanh  (bf16 operands, f32 accumulate)
    ctx = ctx_ref[...].astype(jnp.bfloat16)
    h = jnp.tanh(
        jnp.dot(ctx, w0_ref[...], preferred_element_type=jnp.float32)
        + b0_ref[...]
    )

    # Fused first layers of ctx2mu / ctx2var: one [Z_PAD, 2*Z_PAD] matmul + tanh.
    t = jnp.tanh(
        jnp.dot(h.astype(jnp.bfloat16), wmv1_ref[...],
                preferred_element_type=jnp.float32)
        + bmv1_ref[...]
    )

    # Fused second layers (block-diagonal weight): one [2*Z_PAD, 2*Z_PAD] matmul.
    pre = (
        jnp.dot(t.astype(jnp.bfloat16), wmv2_ref[...],
                preferred_element_type=jnp.float32)
        + bmv2_ref[...]
    )

    mu = pre[:, :z_pad]
    var = jnp.logaddexp(pre[:, z_pad:], 0.0)   # numerically-stable softplus
    std = jnp.sqrt(var)
    z = eps_ref[...].astype(jnp.float32) * std + mu

    # Lane-dense, lane-aligned stores into the concatenated output slab.
    out_ref[:, 0:z_pad] = z.astype(out_ref.dtype)
    out_ref[:, z_pad:2 * z_pad] = mu.astype(out_ref.dtype)
    out_ref[:, 2 * z_pad:3 * z_pad] = var.astype(out_ref.dtype)


def gaussian_variation(context, epsilon, params, *, tile_b=512):
    """Fused GaussianVariation forward pass.

    context: [B, input_dim] float32
    epsilon: [B, z_dim] float32 (standard normal noise, stands in for torch.randn)
    params:  dict with w0,b0,wm1,bm1,wm2,bm2,wv1,bv1,wv2,bv2
             (weights [in, out], biases [1, out], all float32)
    returns: (z, mu, var), each [B, z_dim] float32
    """
    B, input_dim = context.shape
    z_dim = params["w0"].shape[1]

    in_pad = _round_up(input_dim, 128)
    z_pad = _round_up(z_dim, 128)

    tile_b = min(tile_b, _round_up(B, 8))
    b_pad = _round_up(B, tile_b)

    # Pad activations (batch to tile multiple, features to 128 lanes).
    ctx_p = jnp.pad(context.astype(jnp.float32),
                    ((0, b_pad - B), (0, in_pad - input_dim)))
    eps_p = jnp.pad(epsilon.astype(jnp.float32),
                    ((0, b_pad - B), (0, z_pad - z_dim)))

    def pad_w(w, rows, cols):
        return jnp.pad(w, ((0, rows - w.shape[0]), (0, cols - w.shape[1])))

    # ctx_fc
    w0 = pad_w(params["w0"], in_pad, z_pad).astype(jnp.bfloat16)
    b0 = pad_w(params["b0"], 1, z_pad).astype(jnp.float32)

    # Fused first layers: [Z_PAD, 2*Z_PAD] = [ wm1 | wv1 ]
    wmv1 = jnp.concatenate(
        [pad_w(params["wm1"], z_pad, z_pad), pad_w(params["wv1"], z_pad, z_pad)],
        axis=1).astype(jnp.bfloat16)
    bmv1 = jnp.concatenate(
        [pad_w(params["bm1"], 1, z_pad), pad_w(params["bv1"], 1, z_pad)],
        axis=1).astype(jnp.float32)

    # Fused second layers: block-diagonal [2*Z_PAD, 2*Z_PAD]
    zero = jnp.zeros((z_pad, z_pad), jnp.float32)
    wmv2 = jnp.concatenate(
        [jnp.concatenate([pad_w(params["wm2"], z_pad, z_pad), zero], axis=1),
         jnp.concatenate([zero, pad_w(params["wv2"], z_pad, z_pad)], axis=1)],
        axis=0).astype(jnp.bfloat16)
    bmv2 = jnp.concatenate(
        [pad_w(params["bm2"], 1, z_pad), pad_w(params["bv2"], 1, z_pad)],
        axis=1).astype(jnp.float32)

    grid = (b_pad // tile_b,)

    def tiled(cols):
        return pl.BlockSpec((tile_b, cols), lambda i: (i, 0))

    def resident(shape):
        # Constant block index -> Pallas keeps the block resident (no re-DMA per step).
        return pl.BlockSpec(shape, lambda i: (0, 0))

    out = pl.pallas_call(
        functools.partial(_gaussian_variation_kernel, z_pad=z_pad),
        out_shape=jax.ShapeDtypeStruct((b_pad, 3 * z_pad), jnp.float32),
        grid=grid,
        in_specs=[
            tiled(in_pad),                      # ctx tile
            tiled(z_pad),                       # eps tile
            resident((in_pad, z_pad)),          # w0
            resident((1, z_pad)),               # b0
            resident((z_pad, 2 * z_pad)),       # wmv1 (fused wm1|wv1)
            resident((1, 2 * z_pad)),           # bmv1
            resident((2 * z_pad, 2 * z_pad)),   # wmv2 (block-diag wm2/wv2)
            resident((1, 2 * z_pad)),           # bmv2
        ],
        out_specs=tiled(3 * z_pad),             # concatenated z|mu|var slab
        compiler_params=pltpu.CompilerParams(
            dimension_semantics=("parallel",),      # shards batch axis on v7x's 2 TCs
            vmem_limit_bytes=32 * 1024 * 1024,      # explicit; fits v5e/v6e/v7x scoped VMEM
        ),
    )(ctx_p, eps_p, w0, b0, wmv1, bmv1, wmv2, bmv2)

    z = out[:B, 0:z_dim]
    mu = out[:B, z_pad:z_pad + z_dim]
    var = out[:B, 2 * z_pad:2 * z_pad + z_dim]
    return z, mu, var


def init_params(key, input_dim, z_dim):
    """Deterministic synthetic parameter init (uniform, Linear-like)."""
    keys = jax.random.split(key, 10)

    def lin(kw, kb, fan_in, fan_out):
        bound = 1.0 / jnp.sqrt(fan_in)
        w = jax.random.uniform(kw, (fan_in, fan_out), jnp.float32, -bound, bound)
        b = jax.random.uniform(kb, (1, fan_out), jnp.float32, -bound, bound)
        return w, b

    w0, b0 = lin(keys[0], keys[1], input_dim, z_dim)
    wm1, bm1 = lin(keys[2], keys[3], z_dim, z_dim)
    wm2, bm2 = lin(keys[4], keys[5], z_dim, z_dim)
    wv1, bv1 = lin(keys[6], keys[7], z_dim, z_dim)
    wv2, bv2 = lin(keys[8], keys[9], z_dim, z_dim)
    return dict(w0=w0, b0=b0, wm1=wm1, bm1=bm1, wm2=wm2, bm2=bm2,
                wv1=wv1, bv1=bv1, wv2=wv2, bv2=bv2)


def reference(context, epsilon, p):
    """Plain-JAX f32 reference of the PyTorch forward, for verification."""
    h = jnp.tanh(context @ p["w0"] + p["b0"])
    mu = jnp.tanh(h @ p["wm1"] + p["bm1"]) @ p["wm2"] + p["bm2"]
    var = jax.nn.softplus(jnp.tanh(h @ p["wv1"] + p["bv1"]) @ p["wv2"] + p["bv2"])
    std = jnp.sqrt(var)
    z = epsilon * std + mu
    return z, mu, var


if __name__ == "__main__":
    B, INPUT_DIM, Z_DIM = 8, 32, 16

    key = jax.random.PRNGKey(0)
    k_ctx, k_eps, k_params = jax.random.split(key, 3)

    context = jax.random.normal(k_ctx, (B, INPUT_DIM), jnp.float32)
    # TODO(synk): torch.randn inside forward() is replaced by explicit JAX noise passed in.
    epsilon = jax.random.normal(k_eps, (B, Z_DIM), jnp.float32)
    params = init_params(k_params, INPUT_DIM, Z_DIM)

    z, mu, var = gaussian_variation(context, epsilon, params)
    jax.block_until_ready((z, mu, var))

    z_ref, mu_ref, var_ref = reference(context, epsilon, params)
    # Tolerance loosened vs pure-f32 because matmul operands are bf16 (f32 accumulate).
    assert jnp.allclose(z, z_ref, atol=5e-2, rtol=5e-2), "z mismatch"
    assert jnp.allclose(mu, mu_ref, atol=5e-2, rtol=5e-2), "mu mismatch"
    assert jnp.allclose(var, var_ref, atol=5e-2, rtol=5e-2), "var mismatch"

    print("KERNEL_OK")
</pallas_src>

<mosaic_0001>
module attributes {stable_mosaic.version = 11 : i64} {
  func.func @_gaussian_variation_kernel(%arg0: i32, %arg1: memref<8x128xf32, #tpu.memory_space<vmem>>, %arg2: memref<8x128xf32, #tpu.memory_space<vmem>>, %arg3: memref<128x128xbf16, #tpu.memory_space<vmem>>, %arg4: memref<1x128xf32, #tpu.memory_space<vmem>>, %arg5: memref<128x256xbf16, #tpu.memory_space<vmem>>, %arg6: memref<1x256xf32, #tpu.memory_space<vmem>>, %arg7: memref<256x256xbf16, #tpu.memory_space<vmem>>, %arg8: memref<1x256xf32, #tpu.memory_space<vmem>>, %arg9: memref<8x384xf32, #tpu.memory_space<vmem>>) attributes {dimension_semantics = [#tpu.dimension_semantics<parallel>], iteration_bounds = array<i64: 1>, scalar_prefetch = 0 : i64, scratch_operands = 0 : i64, tpu.core_type = #tpu.core_type<tc>, window_params = [{transform_indices = @transform_0, window_bounds = array<i64: 8, 128>}, {transform_indices = @transform_1, window_bounds = array<i64: 8, 128>}, {pipeline_mode = #tpu.pipeline_mode<synchronous>, transform_indices = @transform_2, window_bounds = array<i64: 128, 128>}, {pipeline_mode = #tpu.pipeline_mode<synchronous>, transform_indices = @transform_3, window_bounds = array<i64: 1, 128>}, {pipeline_mode = #tpu.pipeline_mode<synchronous>, transform_indices = @transform_4, window_bounds = array<i64: 128, 256>}, {pipeline_mode = #tpu.pipeline_mode<synchronous>, transform_indices = @transform_5, window_bounds = array<i64: 1, 256>}, {pipeline_mode = #tpu.pipeline_mode<synchronous>, transform_indices = @transform_6, window_bounds = array<i64: 256, 256>}, {pipeline_mode = #tpu.pipeline_mode<synchronous>, transform_indices = @transform_7, window_bounds = array<i64: 1, 256>}, {transform_indices = @transform_8, window_bounds = array<i64: 8, 384>}]} {
    %c0 = arith.constant 0 : index
    %c0_0 = arith.constant 0 : index
    %0 = vector.load %arg1[%c0, %c0_0] : memref<8x128xf32, #tpu.memory_space<vmem>>, vector<8x128xf32>
    %1 = arith.truncf %0 : vector<8x128xf32> to vector<8x128xbf16>
    %c0_1 = arith.constant 0 : index
    %c0_2 = arith.constant 0 : index
    %2 = vector.load %arg3[%c0_1, %c0_2] : memref<128x128xbf16, #tpu.memory_space<vmem>>, vector<128x128xbf16>
    %cst = arith.constant dense<0.000000e+00> : vector<8x128xf32>
    %3 = tpu.matmul %1, %2, %cst {dimension_numbers = #tpu.dot_dimension_numbers<[1], [0], [0], [1], [0, 0, 1, 1], [], []>} : vector<8x128xbf16>, vector<128x128xbf16>, vector<8x128xf32> -> vector<8x128xf32>
    %c0_3 = arith.constant 0 : index
    %c0_4 = arith.constant 0 : index
    %4 = vector.load %arg4[%c0_3, %c0_4] : memref<1x128xf32, #tpu.memory_space<vmem>>, vector<1x128xf32>
    %5 = vector.broadcast %4 : vector<1x128xf32> to vector<8x128xf32>
    %6 = arith.addf %3, %5 : vector<8x128xf32>
    %7 = math.tanh %6 : vector<8x128xf32>
    %8 = arith.truncf %7 : vector<8x128xf32> to vector<8x128xbf16>
    %c0_5 = arith.constant 0 : index
    %c0_6 = arith.constant 0 : index
    %9 = vector.load %arg5[%c0_5, %c0_6] : memref<128x256xbf16, #tpu.memory_space<vmem>>, vector<128x256xbf16>
    %cst_7 = arith.constant dense<0.000000e+00> : vector<8x256xf32>
    %10 = tpu.matmul %8, %9, %cst_7 {dimension_numbers = #tpu.dot_dimension_numbers<[1], [0], [0], [1], [0, 0, 1, 1], [], []>} : vector<8x128xbf16>, vector<128x256xbf16>, vector<8x256xf32> -> vector<8x256xf32>
    %c0_8 = arith.constant 0 : index
    %c0_9 = arith.constant 0 : index
    %11 = vector.load %arg6[%c0_8, %c0_9] : memref<1x256xf32, #tpu.memory_space<vmem>>, vector<1x256xf32>
    %12 = vector.broadcast %11 : vector<1x256xf32> to vector<8x256xf32>
    %13 = arith.addf %10, %12 : vector<8x256xf32>
    %14 = math.tanh %13 : vector<8x256xf32>
    %15 = arith.truncf %14 : vector<8x256xf32> to vector<8x256xbf16>
    %c0_10 = arith.constant 0 : index
    %c0_11 = arith.constant 0 : index
    %16 = vector.load %arg7[%c0_10, %c0_11] : memref<256x256xbf16, #tpu.memory_space<vmem>>, vector<256x256xbf16>
    %cst_12 = arith.constant dense<0.000000e+00> : vector<8x256xf32>
    %17 = tpu.matmul %15, %16, %cst_12 {dimension_numbers = #tpu.dot_dimension_numbers<[1], [0], [0], [1], [0, 0, 1, 1], [], []>} : vector<8x256xbf16>, vector<256x256xbf16>, vector<8x256xf32> -> vector<8x256xf32>
    %c0_13 = arith.constant 0 : index
    %c0_14 = arith.constant 0 : index
    %18 = vector.load %arg8[%c0_13, %c0_14] : memref<1x256xf32, #tpu.memory_space<vmem>>, vector<1x256xf32>
    %19 = vector.broadcast %18 : vector<1x256xf32> to vector<8x256xf32>
    %20 = arith.addf %17, %19 : vector<8x256xf32>
    %21 = vector.extract_strided_slice %20 {offsets = [0, 0], sizes = [8, 128], strides = [1, 1]} : vector<8x256xf32> to vector<8x128xf32>
    %22 = vector.extract_strided_slice %20 {offsets = [0, 128], sizes = [8, 128], strides = [1, 1]} : vector<8x256xf32> to vector<8x128xf32>
    %cst_15 = arith.constant 0.000000e+00 : f32
    %23 = vector.broadcast %cst_15 : f32 to vector<8x128xf32>
    %24 = arith.maximumf %22, %23 : vector<8x128xf32>
    %25 = vector.broadcast %cst_15 : f32 to vector<8x128xf32>
    %26 = arith.subf %22, %25 : vector<8x128xf32>
    %27 = arith.cmpf one, %26, %26 : vector<8x128xf32>
    %28 = vector.broadcast %cst_15 : f32 to vector<8x128xf32>
    %29 = arith.addf %22, %28 : vector<8x128xf32>
    %30 = math.absf %26 : vector<8x128xf32>
    %cst_16 = arith.constant 0.000000e+00 : f32
    %31 = vector.broadcast %cst_16 : f32 to vector<8x128xf32>
    %32 = arith.subf %31, %30 : vector<8x128xf32>
    %33 = math.exp %32 : vector<8x128xf32>
    %34 = math.log1p %33 : vector<8x128xf32>
    %35 = arith.addf %24, %34 : vector<8x128xf32>
    %36 = arith.select %27, %29, %35 : vector<8x128xi1>, vector<8x128xf32>
    %37 = math.sqrt %36 : vector<8x128xf32>
    %c0_17 = arith.constant 0 : index
    %c0_18 = arith.constant 0 : index
    %38 = vector.load %arg2[%c0_17, %c0_18] : memref<8x128xf32, #tpu.memory_space<vmem>>, vector<8x128xf32>
    %39 = arith.mulf %38, %37 : vector<8x128xf32>
    %40 = arith.addf %39, %21 : vector<8x128xf32>
    %c0_19 = arith.constant 0 : index
    %c0_20 = arith.constant 0 : index
    %41 = vector.load %arg9[%c0_19, %c0_20] : memref<8x384xf32, #tpu.memory_space<vmem>>, vector<8x128xf32>
    tpu.vector_store %arg9[%c0_19, %c0_20], %40 {strides = array<i32>} : memref<8x384xf32, #tpu.memory_space<vmem>>, vector<8x128xf32>,
    %c0_21 = arith.constant 0 : index
    %c128 = arith.constant 128 : index
    %42 = vector.load %arg9[%c0_21, %c128] : memref<8x384xf32, #tpu.memory_space<vmem>>, vector<8x128xf32>
    tpu.vector_store %arg9[%c0_21, %c128], %21 {strides = array<i32>} : memref<8x384xf32, #tpu.memory_space<vmem>>, vector<8x128xf32>,
    %c0_22 = arith.constant 0 : index
    %c256 = arith.constant 256 : index
    %43 = vector.load %arg9[%c0_22, %c256] : memref<8x384xf32, #tpu.memory_space<vmem>>, vector<8x128xf32>
    tpu.vector_store %arg9[%c0_22, %c256], %36 {strides = array<i32>} : memref<8x384xf32, #tpu.memory_space<vmem>>, vector<8x128xf32>,
    return
  }
  func.func @transform_0(%arg0: i32) -> (i32, i32) {
    %c0_i32 = arith.constant 0 : i32
    %c0_i32_0 = arith.constant 0 : i32
    return %arg0, %c0_i32 : i32, i32
  }
  func.func @transform_1(%arg0: i32) -> (i32, i32) {
    %c0_i32 = arith.constant 0 : i32
    %c0_i32_0 = arith.constant 0 : i32
    return %arg0, %c0_i32 : i32, i32
  }
  func.func @transform_2(%arg0: i32) -> (i32, i32) {
    %c0_i32 = arith.constant 0 : i32
    %c0_i32_0 = arith.constant 0 : i32
    %c0_i32_1 = arith.constant 0 : i32
    return %c0_i32, %c0_i32_0 : i32, i32
  }
  func.func @transform_3(%arg0: i32) -> (i32, i32) {
    %c0_i32 = arith.constant 0 : i32
    %c0_i32_0 = arith.constant 0 : i32
    %c0_i32_1 = arith.constant 0 : i32
    return %c0_i32, %c0_i32_0 : i32, i32
  }
  func.func @transform_4(%arg0: i32) -> (i32, i32) {
    %c0_i32 = arith.constant 0 : i32
    %c0_i32_0 = arith.constant 0 : i32
    %c0_i32_1 = arith.constant 0 : i32
    return %c0_i32, %c0_i32_0 : i32, i32
  }
  func.func @transform_5(%arg0: i32) -> (i32, i32) {
    %c0_i32 = arith.constant 0 : i32
    %c0_i32_0 = arith.constant 0 : i32
    %c0_i32_1 = arith.constant 0 : i32
    return %c0_i32, %c0_i32_0 : i32, i32
  }
  func.func @transform_6(%arg0: i32) -> (i32, i32) {
    %c0_i32 = arith.constant 0 : i32
    %c0_i32_0 = arith.constant 0 : i32
    %c0_i32_1 = arith.constant 0 : i32
    return %c0_i32, %c0_i32_0 : i32, i32
  }
  func.func @transform_7(%arg0: i32) -> (i32, i32) {
    %c0_i32 = arith.constant 0 : i32
    %c0_i32_0 = arith.constant 0 : i32
    %c0_i32_1 = arith.constant 0 : i32
    return %c0_i32, %c0_i32_0 : i32, i32
  }
  func.func @transform_8(%arg0: i32) -> (i32, i32) {
    %c0_i32 = arith.constant 0 : i32
    %c0_i32_0 = arith.constant 0 : i32
    return %arg0, %c0_i32 : i32, i32
  }
}

</mosaic_0001>

<llo_original>
// kernel: tpu_custom_call.1
$region0: #{tpu_custom_call.1}
  #allocation0 [shape = 'u32[]', space=smem, size = 0x4, offset = 0x4, fixed_abs, tag = 'smem constant byte address 0x4 - core index']
  #allocation1 [shape = 'u32[144,128]{1,0:T(1,128)}', space=vmem, size = 0x12000, scoped, tag = 'internal scratch']
  %s0 = inlined_call_operand.hbm [shape: f32[8,128], index: 0, kind: input, shape index: {}]
  %s1 = inlined_call_operand.hbm [shape: f32[8,128], index: 1, kind: input, shape index: {}]
  %s2 = inlined_call_operand.hbm [shape: bf16[128,128], index: 2, kind: input, shape index: {}]
  %s3 = inlined_call_operand.vmem [shape: f32[1,128], index: 3, kind: input, shape index: {}]
  %s4 = inlined_call_operand.hbm [shape: bf16[128,256], index: 4, kind: input, shape index: {}]
  %s5 = inlined_call_operand.vmem [shape: f32[1,256], index: 5, kind: input, shape index: {}]
  %s6 = inlined_call_operand.hbm [shape: bf16[256,256], index: 6, kind: input, shape index: {}]
  %s7 = inlined_call_operand.vmem [shape: f32[1,256], index: 7, kind: input, shape index: {}]
  %s8 = inlined_call_operand.hbm [shape: f32[8,384], index: 8, kind: output, shape index: {}]
  %s9 = sld [smem:[#allocation0]]
  $region62: #{tpu_custom_call.1} parent=0
    _
  %s11 = ssub.s32 1, %s9
  %s12 = scalar_select 0, %s11, %s9
  $region1: #{tpu_custom_call.1} parent=0
    #allocation2 [shape = 'u8[4096]{0}', space=vmem, size = 0x1000, scoped, tag = 'input window, operand 0, single buffered']
    #allocation3 [shape = 's32[1]{0}', space=sflag, size = 0x4, scoped, tag = 'scoped memory for tpu_custom_call.1']
    #allocation4 [shape = 's32[1]{0}', space=sflag, size = 0x4, scoped, tag = 'scoped memory for tpu_custom_call.1']
    #allocation5 [shape = 'u8[4096]{0}', space=vmem, size = 0x1000, scoped, tag = 'input window, operand 1, single buffered']
    #allocation6 [shape = 's32[1]{0}', space=sflag, size = 0x4, scoped, tag = 'scoped memory for tpu_custom_call.1']
    #allocation7 [shape = 'u8[32768]{0}', space=vmem, size = 0x8000, scoped, tag = 'input window, operand 2, single buffered']
    #allocation8 [shape = 'u8[65536]{0}', space=vmem, size = 0x10000, scoped, tag = 'input window, operand 4, single buffered']
    #allocation9 [shape = 's32[1]{0}', space=sflag, size = 0x4, scoped, tag = 'scoped memory for tpu_custom_call.1']
    #allocation10 [shape = 'u8[131072]{0}', space=vmem, size = 0x20000, scoped, tag = 'input window, operand 6, single buffered']
    #allocation11 [shape = 'u8[12288]{0}', space=vmem, size = 0x3000, scoped, tag = 'output window, operand 0, single buffered']
    %13 = vsyncpa [#allocation3], 0
    %14 = vsyncpa [#allocation6], 0
    %15 = vsyncpa [#allocation9], 0
    %16 = vsyncpa [#allocation4], 0
    // Predicated region
    $region2: #{tpu_custom_call.1} parent=1 // pred_check
      _
    $region3: #{tpu_custom_call.1} parent=1 // pred_check_branch
      %18 = sbr.rel (0) target = $region5
    $region4: #{tpu_custom_call.1} parent=1 // pred_region
      %s20 = ssub.s32 128, 128
      %21 = vsyncadd [#allocation3], %s20
      %s23 = sshll.u32 [#allocation2], 4
      %s24 = int_to_ptr.vmem [resolvable:$true] %s23
      %26 = dma.hbm_to_vmem [thread:$0]  %s0, 128, %s24, [#allocation3]
    $region5: #{tpu_custom_call.1} parent=1 // pred_fallthru
      _
    // Predicated region
    $region6: #{tpu_custom_call.1} parent=1 // pred_check
      _
    $region7: #{tpu_custom_call.1} parent=1 // pred_check_branch
      %28 = sbr.rel (0) target = $region9
    $region8: #{tpu_custom_call.1} parent=1 // pred_region
      %s30 = ssub.s32 128, 128
      %31 = vsyncadd [#allocation6], %s30
      %s33 = sshll.u32 [#allocation5], 4
      %s34 = int_to_ptr.vmem [resolvable:$true] %s33
      %36 = dma.hbm_to_vmem [thread:$0]  %s1, 128, %s34, [#allocation6]
    $region9: #{tpu_custom_call.1} parent=1 // pred_fallthru
      _
    // Predicated region
    $region10: #{tpu_custom_call.1} parent=1 // pred_check
      _
    $region11: #{tpu_custom_call.1} parent=1 // pred_check_branch
      %38 = sbr.rel (0) target = $region13
    $region12: #{tpu_custom_call.1} parent=1 // pred_region
      %s40 = ssub.s32 1024, 1024
      %41 = vsyncadd [#allocation6], %s40
      %s42 = sshll.u32 [#allocation7], 4
      %s43 = int_to_ptr.vmem [resolvable:$true] %s42
      %48 = dma.hbm_to_vmem [thread:$0]  %s2, 1024, %s43, [#allocation6], 64, 64, 4
    $region13: #{tpu_custom_call.1} parent=1 // pred_fallthru
      _
    // Predicated region
    $region14: #{tpu_custom_call.1} parent=1 // pred_check
      _
    $region15: #{tpu_custom_call.1} parent=1 // pred_check_branch
      %50 = sbr.rel (0) target = $region17
    $region16: #{tpu_custom_call.1} parent=1 // pred_region
      _
    $region17: #{tpu_custom_call.1} parent=1 // pred_fallthru
      _
    // Predicated region
    $region18: #{tpu_custom_call.1} parent=1 // pred_check
      _
    $region19: #{tpu_custom_call.1} parent=1 // pred_check_branch
      %52 = sbr.rel (0) target = $region21
    $region20: #{tpu_custom_call.1} parent=1 // pred_region
      %s54 = ssub.s32 2048, 2048
      %55 = vsyncadd [#allocation9], %s54
      %s56 = sshll.u32 [#allocation8], 4
      %s57 = int_to_ptr.vmem [resolvable:$true] %s56
      %62 = dma.hbm_to_vmem [thread:$0]  %s4, 2048, %s57, [#allocation9], 128, 128, 8
    $region21: #{tpu_custom_call.1} parent=1 // pred_fallthru
      _
    // Predicated region
    $region22: #{tpu_custom_call.1} parent=1 // pred_check
      _
    $region23: #{tpu_custom_call.1} parent=1 // pred_check_branch
      %64 = sbr.rel (0) target = $region25
    $region24: #{tpu_custom_call.1} parent=1 // pred_region
      _
    $region25: #{tpu_custom_call.1} parent=1 // pred_fallthru
      _
    // Predicated region
    $region26: #{tpu_custom_call.1} parent=1 // pred_check
      _
    $region27: #{tpu_custom_call.1} parent=1 // pred_check_branch
      %66 = sbr.rel (0) target = $region29
    $region28: #{tpu_custom_call.1} parent=1 // pred_region
      %s68 = ssub.s32 4096, 4096
      %69 = vsyncadd [#allocation9], %s68
      %s70 = sshll.u32 [#allocation10], 4
      %s71 = int_to_ptr.vmem [resolvable:$true] %s70
      %76 = dma.hbm_to_vmem [thread:$0]  %s6, 4096, %s71, [#allocation9], 128, 128, 8
    $region29: #{tpu_custom_call.1} parent=1 // pred_fallthru
      _
    // Predicated region
    $region30: #{tpu_custom_call.1} parent=1 // pred_check
      _
    $region31: #{tpu_custom_call.1} parent=1 // pred_check_branch
      %78 = sbr.rel (0) target = $region33
    $region32: #{tpu_custom_call.1} parent=1 // pred_region
      _
    $region33: #{tpu_custom_call.1} parent=1 // pred_fallthru
      _
    // Predicated region
    $region34: #{tpu_custom_call.1} parent=1 // pred_check
      _
    $region35: #{tpu_custom_call.1} parent=1 // pred_check_branch
      %80 = sbr.rel (0) target = $region37
    $region36: #{tpu_custom_call.1} parent=1 // pred_region
      %81 = dma.done [#allocation3], 128
    $region37: #{tpu_custom_call.1} parent=1 // pred_fallthru
      _
    // Predicated region
    $region38: #{tpu_custom_call.1} parent=1 // pred_check
      _
    $region39: #{tpu_custom_call.1} parent=1 // pred_check_branch
      %83 = sbr.rel (0) target = $region41
    $region40: #{tpu_custom_call.1} parent=1 // pred_region
      %84 = dma.done [#allocation6], 128
    $region41: #{tpu_custom_call.1} parent=1 // pred_fallthru
      _
    // Predicated region
    $region42: #{tpu_custom_call.1} parent=1 // pred_check
      _
    $region43: #{tpu_custom_call.1} parent=1 // pred_check_branch
      %86 = sbr.rel (0) target = $region45
    $region44: #{tpu_custom_call.1} parent=1 // pred_region
      %87 = dma.done [#allocation6], 1024
    $region45: #{tpu_custom_call.1} parent=1 // pred_fallthru
      _
    // Predicated region
    $region46: #{tpu_custom_call.1} parent=1 // pred_check
      _
    $region47: #{tpu_custom_call.1} parent=1 // pred_check_branch
      %89 = sbr.rel (0) target = $region49
    $region48: #{tpu_custom_call.1} parent=1 // pred_region
      %90 = dma.done [#allocation9], 2048
    $region49: #{tpu_custom_call.1} parent=1 // pred_fallthru
      _
    // Predicated region
    $region50: #{tpu_custom_call.1} parent=1 // pred_check
      _
    $region51: #{tpu_custom_call.1} parent=1 // pred_check_branch
      %92 = sbr.rel (0) target = $region53
    $region52: #{tpu_custom_call.1} parent=1 // pred_region
      %93 = dma.done [#allocation9], 4096
    $region53: #{tpu_custom_call.1} parent=1 // pred_fallthru
      _
    %v95 = vld [vmem:[#allocation2] sm:$0xff]
    %v96 = vpack.c.bf16 %v95, %v95
    %v97 = vld [vmem:[#allocation7] sm:$0xf]
    %v98 = vld [vmem:[#allocation7 + $0x4] sm:$0xf]
    %v99 = vld [vmem:[#allocation7 + $0x8] sm:$0xf]
    %v100 = vld [vmem:[#allocation7 + $0xc] sm:$0xf]
    %v101 = vld [vmem:[#allocation7 + $0x10] sm:$0xf]
    %v102 = vld [vmem:[#allocation7 + $0x14] sm:$0xf]
    %v103 = vld [vmem:[#allocation7 + $0x18] sm:$0xf]
    %v104 = vld [vmem:[#allocation7 + $0x1c] sm:$0xf]
    %v105 = vld [vmem:[#allocation7 + $0x20] sm:$0xf]
    %v106 = vld [vmem:[#allocation7 + $0x24] sm:$0xf]
    %v107 = vld [vmem:[#allocation7 + $0x28] sm:$0xf]
    %v108 = vld [vmem:[#allocation7 + $0x2c] sm:$0xf]
    %v109 = vld [vmem:[#allocation7 + $0x30] sm:$0xf]
    %v110 = vld [vmem:[#allocation7 + $0x34] sm:$0xf]
    %v111 = vld [vmem:[#allocation7 + $0x38] sm:$0xf]
    %v112 = vld [vmem:[#allocation7 + $0x3c] sm:$0xf]
    %v113 = vld [vmem:[%s3] sm:$0x1]
    %v115 = vlaneseq
    %v116 = vshrl.u32 %v115, 7
    %v117 = vsub.s32 0, %v116
    %v118 = vrot.slane %v113, %v117
    %v136 = vunpack.c.l.b16 %v97
    %v137 = vunpack.c.l.b16 %v98
    %v138 = vunpack.c.l.b16 %v99
    %v139 = vunpack.c.l.b16 %v100
    %v140 = vunpack.c.l.b16 %v101
    %v141 = vunpack.c.l.b16 %v102
    %v142 = vunpack.c.l.b16 %v103
    %v143 = vunpack.c.l.b16 %v104
    %v144 = vunpack.c.l.b16 %v105
    %v145 = vunpack.c.l.b16 %v106
    %v146 = vunpack.c.l.b16 %v107
    %v147 = vunpack.c.l.b16 %v108
    %v148 = vunpack.c.l.b16 %v109
    %v149 = vunpack.c.l.b16 %v110
    %v150 = vunpack.c.l.b16 %v111
    %v151 = vunpack.c.l.b16 %v112
    %v152 = vpack.c.b16 %v137, %v136
    %v153 = vpack.c.b16 %v139, %v138
    %v154 = vpack.c.b16 %v141, %v140
    %v155 = vpack.c.b16 %v143, %v142
    %v156 = vpack.c.b16 %v145, %v144
    %v157 = vpack.c.b16 %v147, %v146
    %v158 = vpack.c.b16 %v149, %v148
    %v159 = vpack.c.b16 %v151, %v150
    %168 = vmatprep.subr.bf16.mxu0 0
    %169 = vmatpush1.bf16.msra.mxu0 %v152
    %170 = vmatprep.subr.bf16.mxu0 0
    %171 = vmatpush1.bf16.msra.mxu0 %v153
    %172 = vmatprep.subr.bf16.mxu0 0
    %173 = vmatpush1.bf16.msra.mxu0 %v154
    %174 = vmatprep.subr.bf16.mxu0 0
    %175 = vmatpush1.bf16.msra.mxu0 %v155
    %176 = vmatprep.subr.bf16.mxu0 0
    %177 = vmatpush1.bf16.msra.mxu0 %v156
    %178 = vmatprep.subr.bf16.mxu0 0
    %179 = vmatpush1.bf16.msra.mxu0 %v157
    %180 = vmatprep.subr.bf16.mxu0 0
    %181 = vmatpush1.bf16.msra.mxu0 %v158
    %182 = vmatprep.subr.bf16.mxu0 0
    %183 = vmatpush1.bf16.msra.mxu0 %v159
    %184 = vmatprep.subr.bf16.mxu0 0
    %185 = vmatpush1.bf16.msra.mxu0 0
    %186 = vmatprep.subr.bf16.mxu0 0
    %187 = vmatpush1.bf16.msra.mxu0 0
    %188 = vmatprep.subr.bf16.mxu0 0
    %189 = vmatpush1.bf16.msra.mxu0 0
    %190 = vmatprep.subr.bf16.mxu0 0
    %191 = vmatpush1.bf16.msra.mxu0 0
    %192 = vmatprep.subr.bf16.mxu0 0
    %193 = vmatpush1.bf16.msra.mxu0 0
    %194 = vmatprep.subr.bf16.mxu0 0
    %195 = vmatpush1.bf16.msra.mxu0 0
    %196 = vmatprep.subr.bf16.mxu0 0
    %197 = vmatpush1.bf16.msra.mxu0 0
    %198 = vmatprep.subr.bf16.mxu0 0
    %199 = vmatpush1.bf16.msra.mxu0 0
    %200 = vmatprep.mubr.bf16.mxu0 0
    %201 = vmatmul.mubr.bf16.gmra.mrb[0].mxu0 %v96
    %v202 = vpop.f32.mrb[0].mxu0
    %v203 = vadd.f32 %v118, %v202
    %v204 = vpop.f32.mrb[0].mxu0
    %v205 = vpop.f32.mrb[0].mxu0
    %v206 = vpop.f32.mrb[0].mxu0
    %207 = vdwg.mxu0
    %v208 = vtanh.pop %v203
    %v209 = vpack.c.bf16 %v208, %v208
    %v210 = vld [vmem:[#allocation8] sm:$0xff]
    %v211 = vld [vmem:[#allocation8 + $0x8] sm:$0xff]
    %v212 = vld [vmem:[#allocation8 + $0x10] sm:$0xff]
    %v213 = vld [vmem:[#allocation8 + $0x18] sm:$0xff]
    %v214 = vld [vmem:[#allocation8 + $0x20] sm:$0xff]
    %v215 = vld [vmem:[#allocation8 + $0x28] sm:$0xff]
    %v216 = vld [vmem:[#allocation8 + $0x30] sm:$0xff]
    %v217 = vld [vmem:[#allocation8 + $0x38] sm:$0xff]
    %v218 = vld [vmem:[#allocation8 + $0x40] sm:$0xff]
    %v219 = vld [vmem:[#allocation8 + $0x48] sm:$0xff]
    %v220 = vld [vmem:[#allocation8 + $0x50] sm:$0xff]
    %v221 = vld [vmem:[#allocation8 + $0x58] sm:$0xff]
    %v222 = vld [vmem:[#allocation8 + $0x60] sm:$0xff]
    %v223 = vld [vmem:[#allocation8 + $0x68] sm:$0xff]
    %v224 = vld [vmem:[#allocation8 + $0x70] sm:$0xff]
    %v225 = vld [vmem:[#allocation8 + $0x78] sm:$0xff]
    %v226 = vld [vmem:[%s5] sm:$0x3]
    %v228 = vlaneseq
    %v229 = vshrl.u32 %v228, 7
    %v230 = vsub.s32 0, %v229
    %v231 = vrot.slane %v226, %v230
    %v232 = vlaneseq
    %v233 = vshrl.u32 %v232, 7
    %v234 = vsub.s32 1, %v233
    %v235 = vrot.slane %v226, %v234
    %v254 = vunpack.c.l.b16 %v210
    %v255 = vunpack.c.h.b16 %v210
    %v256 = vunpack.c.l.b16 %v211
    %v257 = vunpack.c.h.b16 %v211
    %v258 = vunpack.c.l.b16 %v212
    %v259 = vunpack.c.h.b16 %v212
    %v260 = vunpack.c.l.b16 %v213
    %v261 = vunpack.c.h.b16 %v213
    %v262 = vunpack.c.l.b16 %v214
    %v263 = vunpack.c.h.b16 %v214
    %v264 = vunpack.c.l.b16 %v215
    %v265 = vunpack.c.h.b16 %v215
    %v266 = vunpack.c.l.b16 %v216
    %v267 = vunpack.c.h.b16 %v216
    %v268 = vunpack.c.l.b16 %v217
    %v269 = vunpack.c.h.b16 %v217
    %v270 = vunpack.c.l.b16 %v218
    %v271 = vunpack.c.h.b16 %v218
    %v272 = vunpack.c.l.b16 %v219
    %v273 = vunpack.c.h.b16 %v219
    %v274 = vunpack.c.l.b16 %v220
    %v275 = vunpack.c.h.b16 %v220
    %v276 = vunpack.c.l.b16 %v221
    %v277 = vunpack.c.h.b16 %v221
    %v278 = vunpack.c.l.b16 %v222
    %v279 = vunpack.c.h.b16 %v222
    %v280 = vunpack.c.l.b16 %v223
    %v281 = vunpack.c.h.b16 %v223
    %v282 = vunpack.c.l.b16 %v224
    %v283 = vunpack.c.h.b16 %v224
    %v284 = vunpack.c.l.b16 %v225
    %v285 = vunpack.c.h.b16 %v225
    %v286 = vpack.c.b16 %v256, %v254
    %v287 = vpack.c.b16 %v257, %v255
    %v288 = vpack.c.b16 %v260, %v258
    %v289 = vpack.c.b16 %v261, %v259
    %v290 = vpack.c.b16 %v264, %v262
    %v291 = vpack.c.b16 %v265, %v263
    %v292 = vpack.c.b16 %v268, %v266
    %v293 = vpack.c.b16 %v269, %v267
    %v294 = vpack.c.b16 %v272, %v270
    %v295 = vpack.c.b16 %v273, %v271
    %v296 = vpack.c.b16 %v276, %v274
    %v297 = vpack.c.b16 %v277, %v275
    %v298 = vpack.c.b16 %v280, %v278
    %v299 = vpack.c.b16 %v281, %v279
    %v300 = vpack.c.b16 %v284, %v282
    %v301 = vpack.c.b16 %v285, %v283
    %318 = vmatprep.subr.bf16.mxu0 %v287
    %319 = vmatpush1.bf16.msra.mxu0 %v286
    %320 = vmatprep.subr.bf16.mxu0 %v289
    %321 = vmatpush1.bf16.msra.mxu0 %v288
    %322 = vmatprep.subr.bf16.mxu0 %v291
    %323 = vmatpush1.bf16.msra.mxu0 %v290
    %324 = vmatprep.subr.bf16.mxu0 %v293
    %325 = vmatpush1.bf16.msra.mxu0 %v292
    %326 = vmatprep.subr.bf16.mxu0 %v295
    %327 = vmatpush1.bf16.msra.mxu0 %v294
    %328 = vmatprep.subr.bf16.mxu0 %v297
    %329 = vmatpush1.bf16.msra.mxu0 %v296
    %330 = vmatprep.subr.bf16.mxu0 %v299
    %331 = vmatpush1.bf16.msra.mxu0 %v298
    %332 = vmatprep.subr.bf16.mxu0 %v301
    %333 = vmatpush1.bf16.msra.mxu0 %v300
    %334 = vmatprep.subr.bf16.mxu0 0
    %335 = vmatpush1.bf16.msra.mxu0 0
    %336 = vmatprep.subr.bf16.mxu0 0
    %337 = vmatpush1.bf16.msra.mxu0 0
    %338 = vmatprep.subr.bf16.mxu0 0
    %339 = vmatpush1.bf16.msra.mxu0 0
    %340 = vmatprep.subr.bf16.mxu0 0
    %341 = vmatpush1.bf16.msra.mxu0 0
    %342 = vmatprep.subr.bf16.mxu0 0
    %343 = vmatpush1.bf16.msra.mxu0 0
    %344 = vmatprep.subr.bf16.mxu0 0
    %345 = vmatpush1.bf16.msra.mxu0 0
    %346 = vmatprep.subr.bf16.mxu0 0
    %347 = vmatpush1.bf16.msra.mxu0 0
    %348 = vmatprep.subr.bf16.mxu0 0
    %349 = vmatpush1.bf16.msra.mxu0 0
    %350 = vmatprep.mubr.bf16.mxu0 0
    %351 = vmatmul.mubr.bf16.gmra.mrb[0].mxu0 %v209
    %v352 = vpop.f32.mrb[0].mxu0
    %v353 = vadd.f32 %v231, %v352
    %v354 = vpop.f32.mrb[0].mxu0
    %v355 = vadd.f32 %v235, %v354
    %v356 = vpop.f32.mrb[0].mxu0
    %v357 = vpop.f32.mrb[0].mxu0
    %358 = vdwg.mxu0
    %v359 = vtanh.pop %v353
    %v360 = vtanh.pop %v355
    %v361 = vpack.c.bf16 %v359, %v359
    %v362 = vpack.c.bf16 %v360, %v360
    %v363 = vld [vmem:[#allocation10] sm:$0xff]
    %v364 = vld [vmem:[#allocation10 + $0x8] sm:$0xff]
    %v365 = vld [vmem:[#allocation10 + $0x10] sm:$0xff]
    %v366 = vld [vmem:[#allocation10 + $0x18] sm:$0xff]
    %v367 = vld [vmem:[#allocation10 + $0x20] sm:$0xff]
    %v368 = vld [vmem:[#allocation10 + $0x28] sm:$0xff]
    %v369 = vld [vmem:[#allocation10 + $0x30] sm:$0xff]
    %v370 = vld [vmem:[#allocation10 + $0x38] sm:$0xff]
    %v371 = vld [vmem:[#allocation10 + $0x40] sm:$0xff]
    %v372 = vld [vmem:[#allocation10 + $0x48] sm:$0xff]
    %v373 = vld [vmem:[#allocation10 + $0x50] sm:$0xff]
    %v374 = vld [vmem:[#allocation10 + $0x58] sm:$0xff]
    %v375 = vld [vmem:[#allocation10 + $0x60] sm:$0xff]
    %v376 = vld [vmem:[#allocation10 + $0x68] sm:$0xff]
    %v377 = vld [vmem:[#allocation10 + $0x70] sm:$0xff]
    %v378 = vld [vmem:[#allocation10 + $0x78] sm:$0xff]
    %v379 = vld [vmem:[#allocation10 + $0x80] sm:$0xff]
    %v380 = vld [vmem:[#allocation10 + $0x88] sm:$0xff]
    %v381 = vld [vmem:[#allocation10 + $0x90] sm:$0xff]
    %v382 = vld [vmem:[#allocation10 + $0x98] sm:$0xff]
    %v383 = vld [vmem:[#allocation10 + $0xa0] sm:$0xff]
    %v384 = vld [vmem:[#allocation10 + $0xa8] sm:$0xff]
    %v385 = vld [vmem:[#allocation10 + $0xb0] sm:$0xff]
    %v386 = vld [vmem:[#allocation10 + $0xb8] sm:$0xff]
    %v387 = vld [vmem:[#allocation10 + $0xc0] sm:$0xff]
    %v388 = vld [vmem:[#allocation10 + $0xc8] sm:$0xff]
    %v389 = vld [vmem:[#allocation10 + $0xd0] sm:$0xff]
    %v390 = vld [vmem:[#allocation10 + $0xd8] sm:$0xff]
    %v391 = vld [vmem:[#allocation10 + $0xe0] sm:$0xff]
    %v392 = vld [vmem:[#allocation10 + $0xe8] sm:$0xff]
    %v393 = vld [vmem:[#allocation10 + $0xf0] sm:$0xff]
    %v394 = vld [vmem:[#allocation10 + $0xf8] sm:$0xff]
    %v395 = vld [vmem:[%s7] sm:$0x3]
    %v397 = vlaneseq
    %v398 = vshrl.u32 %v397, 7
    %v399 = vsub.s32 0, %v398
    %v400 = vrot.slane %v395, %v399
    %v401 = vlaneseq
    %v402 = vshrl.u32 %v401, 7
    %v403 = vsub.s32 1, %v402
    %v404 = vrot.slane %v395, %v403
    %v439 = vunpack.c.l.b16 %v363
    %v440 = vunpack.c.h.b16 %v363
    %v441 = vunpack.c.l.b16 %v364
    %v442 = vunpack.c.h.b16 %v364
    %v443 = vunpack.c.l.b16 %v365
    %v444 = vunpack.c.h.b16 %v365
    %v445 = vunpack.c.l.b16 %v366
    %v446 = vunpack.c.h.b16 %v366
    %v447 = vunpack.c.l.b16 %v367
    %v448 = vunpack.c.h.b16 %v367
    %v449 = vunpack.c.l.b16 %v368
    %v450 = vunpack.c.h.b16 %v368
    %v451 = vunpack.c.l.b16 %v369
    %v452 = vunpack.c.h.b16 %v369
    %v453 = vunpack.c.l.b16 %v370
    %v454 = vunpack.c.h.b16 %v370
    %v455 = vunpack.c.l.b16 %v371
    %v456 = vunpack.c.h.b16 %v371
    %v457 = vunpack.c.l.b16 %v372
    %v458 = vunpack.c.h.b16 %v372
    %v459 = vunpack.c.l.b16 %v373
    %v460 = vunpack.c.h.b16 %v373
    %v461 = vunpack.c.l.b16 %v374
    %v462 = vunpack.c.h.b16 %v374
    %v463 = vunpack.c.l.b16 %v375
    %v464 = vunpack.c.h.b16 %v375
    %v465 = vunpack.c.l.b16 %v376
    %v466 = vunpack.c.h.b16 %v376
    %v467 = vunpack.c.l.b16 %v377
    %v468 = vunpack.c.h.b16 %v377
    %v469 = vunpack.c.l.b16 %v378
    %v470 = vunpack.c.h.b16 %v378
    %v471 = vunpack.c.l.b16 %v379
    %v472 = vunpack.c.h.b16 %v379
    %v473 = vunpack.c.l.b16 %v380
    %v474 = vunpack.c.h.b16 %v380
    %v475 = vunpack.c.l.b16 %v381
    %v476 = vunpack.c.h.b16 %v381
    %v477 = vunpack.c.l.b16 %v382
    %v478 = vunpack.c.h.b16 %v382
    %v479 = vunpack.c.l.b16 %v383
    %v480 = vunpack.c.h.b16 %v383
    %v481 = vunpack.c.l.b16 %v384
    %v482 = vunpack.c.h.b16 %v384
    %v483 = vunpack.c.l.b16 %v385
    %v484 = vunpack.c.h.b16 %v385
    %v485 = vunpack.c.l.b16 %v386
    %v486 = vunpack.c.h.b16 %v386
    %v487 = vunpack.c.l.b16 %v387
    %v488 = vunpack.c.h.b16 %v387
    %v489 = vunpack.c.l.b16 %v388
    %v490 = vunpack.c.h.b16 %v388
    %v491 = vunpack.c.l.b16 %v389
    %v492 = vunpack.c.h.b16 %v389
    %v493 = vunpack.c.l.b16 %v390
    %v494 = vunpack.c.h.b16 %v390
    %v495 = vunpack.c.l.b16 %v391
    %v496 = vunpack.c.h.b16 %v391
    %v497 = vunpack.c.l.b16 %v392
    %v498 = vunpack.c.h.b16 %v392
    %v499 = vunpack.c.l.b16 %v393
    %v500 = vunpack.c.h.b16 %v393
    %v501 = vunpack.c.l.b16 %v394
    %v502 = vunpack.c.h.b16 %v394
    %v503 = vpack.c.b16 %v441, %v439
    %v504 = vpack.c.b16 %v442, %v440
    %v505 = vpack.c.b16 %v445, %v443
    %v506 = vpack.c.b16 %v446, %v444
    %v507 = vpack.c.b16 %v449, %v447
    %v508 = vpack.c.b16 %v450, %v448
    %v509 = vpack.c.b16 %v453, %v451
    %v510 = vpack.c.b16 %v454, %v452
    %v511 = vpack.c.b16 %v457, %v455
    %v512 = vpack.c.b16 %v458, %v456
    %v513 = vpack.c.b16 %v461, %v459
    %v514 = vpack.c.b16 %v462, %v460
    %v515 = vpack.c.b16 %v465, %v463
    %v516 = vpack.c.b16 %v466, %v464
    %v517 = vpack.c.b16 %v469, %v467
    %v518 = vpack.c.b16 %v470, %v468
    %v519 = vpack.c.b16 %v473, %v471
    %v520 = vpack.c.b16 %v474, %v472
    %v521 = vpack.c.b16 %v477, %v475
    %v522 = vpack.c.b16 %v478, %v476
    %v523 = vpack.c.b16 %v481, %v479
    %v524 = vpack.c.b16 %v482, %v480
    %v525 = vpack.c.b16 %v485, %v483
    %v526 = vpack.c.b16 %v486, %v484
    %v527 = vpack.c.b16 %v489, %v487
    %v528 = vpack.c.b16 %v490, %v488
    %v529 = vpack.c.b16 %v493, %v491
    %v530 = vpack.c.b16 %v494, %v492
    %v531 = vpack.c.b16 %v497, %v495
    %v532 = vpack.c.b16 %v498, %v496
    %v533 = vpack.c.b16 %v501, %v499
    %v534 = vpack.c.b16 %v502, %v500
    %567 = vmatprep.subr.bf16.mxu0 %v504
    %568 = vmatpush1.bf16.msra.mxu0 %v503
    %569 = vmatprep.subr.bf16.mxu0 %v506
    %570 = vmatpush1.bf16.msra.mxu0 %v505
    %571 = vmatprep.subr.bf16.mxu0 %v508
    %572 = vmatpush1.bf16.msra.mxu0 %v507
    %573 = vmatprep.subr.bf16.mxu0 %v510
    %574 = vmatpush1.bf16.msra.mxu0 %v509
    %575 = vmatprep.subr.bf16.mxu0 %v512
    %576 = vmatpush1.bf16.msra.mxu0 %v511
    %577 = vmatprep.subr.bf16.mxu0 %v514
    %578 = vmatpush1.bf16.msra.mxu0 %v513
    %579 = vmatprep.subr.bf16.mxu0 %v516
    %580 = vmatpush1.bf16.msra.mxu0 %v515
    %581 = vmatprep.subr.bf16.mxu0 %v518
    %582 = vmatpush1.bf16.msra.mxu0 %v517
    %583 = vmatprep.subr.bf16.mxu0 %v520
    %584 = vmatpush1.bf16.msra.mxu0 %v519
    %585 = vmatprep.subr.bf16.mxu0 %v522
    %586 = vmatpush1.bf16.msra.mxu0 %v521
    %587 = vmatprep.subr.bf16.mxu0 %v524
    %588 = vmatpush1.bf16.msra.mxu0 %v523
    %589 = vmatprep.subr.bf16.mxu0 %v526
    %590 = vmatpush1.bf16.msra.mxu0 %v525
    %591 = vmatprep.subr.bf16.mxu0 %v528
    %592 = vmatpush1.bf16.msra.mxu0 %v527
    %593 = vmatprep.subr.bf16.mxu0 %v530
    %594 = vmatpush1.bf16.msra.mxu0 %v529
    %595 = vmatprep.subr.bf16.mxu0 %v532
    %596 = vmatpush1.bf16.msra.mxu0 %v531
    %597 = vmatprep.subr.bf16.mxu0 %v534
    %598 = vmatpush1.bf16.msra.mxu0 %v533
    %599 = vmatprep.mubr.bf16.mxu0 %v362
    %600 = vmatmul.mubr.bf16.gmra.mrb[0].mxu0 %v361
    %v601 = vpop.f32.mrb[0].mxu0
    %v602 = vadd.f32 %v400, %v601
    %v603 = vpop.f32.mrb[0].mxu0
    %v604 = vadd.f32 %v404, %v603
    %v605 = vpop.f32.mrb[0].mxu0
    %v606 = vpop.f32.mrb[0].mxu0
    %607 = vdwg.mxu0
    %v608 = vmax.f32 %v604, 0.0
    %vm609 = vcmp.ne.f32.partialorder %v604, %v604
    %v610 = vadd.f32 %v604, 0.0
    %v611 = vand.u32 2147483647, %v604
    %v612 = vsub.f32 0.0, %v611
    %v613 = vmul.f32 %v612, 1.442695
    %v614 = vpow.pop %v613
    %v615 = vadd.f32 %v614, 1.0
    %v616 = vlog2.pop %v615
    %v617 = vmul.f32 %v616, 0.6931472
    %v618 = vmul.f32 -0.5, %v614
    %v619 = vadd.f32 %v618, 1.0
    %v620 = vmul.f32 %v619, %v614
    %v621 = vand.u32 2147483647, %v614
    %vm622 = vcmp.lt.f32.partialorder %v621, 0.0004427343
    %v623 = vsel %vm622, %v620, %v617
    %v624 = vadd.f32 %v608, %v623
    %v625 = vsel %vm609, %v610, %v624
    %v626 = vrsqrt.pop %v625
    %v627 = vmul.f32 %v625, %v626
    %vm628 = vcmp.eq.f32.partialorder %v625, inf
    %v629 = vsel %vm628, %v625, %v627
    %vm630 = vcmp.eq.f32.partialorder %v625, 0.0
    %v631 = vand.u32 %v625, 2147483648
    %v632 = vsel %vm630, %v631, %v629
    %v633 = vld [vmem:[#allocation5] sm:$0xff]
    %v634 = vmul.f32 %v633, %v632
    %v635 = vadd.f32 %v634, %v602
    %636 = vst [vmem:[#allocation11] sm:$0xff] %v635
    %637 = vst [vmem:[#allocation11 + $0x8] sm:$0xff] %v602
    %638 = vst [vmem:[#allocation11 + $0x10] sm:$0xff] %v625
    // Predicated region
    $region54: #{tpu_custom_call.1} parent=1 // pred_check
      _
    $region55: #{tpu_custom_call.1} parent=1 // pred_check_branch
      %640 = sbr.rel (0) target = $region57
    $region56: #{tpu_custom_call.1} parent=1 // pred_region
      %s642 = ssub.s32 384, 384
      %643 = vsyncadd [#allocation4], %s642
      %s645 = sshll.u32 [#allocation11], 4
      %s646 = int_to_ptr.vmem [resolvable:$true] %s645
      %648 = dma.vmem_to_hbm [thread:$0]  %s646, 384, %s8, [#allocation4]
    $region57: #{tpu_custom_call.1} parent=1 // pred_fallthru
      _
    // Predicated region
    $region58: #{tpu_custom_call.1} parent=1 // pred_check
      _
    $region59: #{tpu_custom_call.1} parent=1 // pred_check_branch
      %650 = sbr.rel (0) target = $region61
    $region60: #{tpu_custom_call.1} parent=1 // pred_region
      %651 = dma.done [#allocation4], 384
    $region61: #{tpu_custom_call.1} parent=1 // pred_fallthru
      _
    %652 = vsyncpa [#allocation3], 1
    %653 = vsyncpa [#allocation6], 1
    %654 = vsyncpa [#allocation9], 1
    %655 = vsyncpa [#allocation4], 1

</llo_original>
